<compile_context>
chip_gen: v7x
topology: tpu7x:2x2x1
jax: 0.10.0
libtpu: 0.0.40
codegen_flags: <defaults>
</compile_context>

<pallas_src>
import functools

import jax
import jax.numpy as jnp
from jax import lax
from jax.experimental import pallas as pl
from jax.experimental.pallas import tpu as pltpu
from jax.scipy.special import logsumexp as _logsumexp

_EPS = 1e-12        # matches torch.nn.functional.normalize default eps
_NEG_BIG = -1e30    # finite "-inf" for masking padded rows/cols (avoids NaN)


# ----------------------------------------------------------------------------
# Kernel: one (row_block, col_block) tile of the logits matrix.
# Emits partial logsumexp blocks for both cross-entropy directions.
# ----------------------------------------------------------------------------
def _contrastive_tile_kernel(v_ref, t_ref, row_lse_ref, col_lse_ref, *,
                             b_real, tile, padded):
    ri = pl.program_id(0)
    ci = pl.program_id(1)

    # MXU matmul: (tile, D) @ (D, tile) -> (tile, tile), f32 accumulation.
    logits = lax.dot_general(
        v_ref[...], t_ref[...],
        dimension_numbers=(((1,), (0,)), ((), ())),
        preferred_element_type=jnp.float32)

    if padded:
        # Mask out padded rows / columns (statically enabled only when B was
        # padded up to the tile multiple).
        row_ids = ri * tile + lax.broadcasted_iota(jnp.int32, (tile, tile), 0)
        col_ids = ci * tile + lax.broadcasted_iota(jnp.int32, (tile, tile), 1)
        valid = jnp.logical_and(row_ids < b_real, col_ids < b_real)
        logits = jnp.where(valid, logits, _NEG_BIG)

    # v->t direction: partial logsumexp over this column block, per row.
    rm = jnp.max(logits, axis=1, keepdims=True)                      # (tile, 1)
    rl = jnp.sum(jnp.exp(logits - rm), axis=1, keepdims=True)        # (tile, 1)
    row_lse_ref[...] = (rm + jnp.log(rl))[None]                      # (1, tile, 1)

    # t->v direction: partial logsumexp over this row block, per column.
    cm = jnp.max(logits, axis=0, keepdims=True)                      # (1, tile)
    cl = jnp.sum(jnp.exp(logits - cm), axis=0, keepdims=True)        # (1, tile)
    col_lse_ref[...] = (cm + jnp.log(cl))[None]                      # (1, 1, tile)


# ----------------------------------------------------------------------------
# VMEM-aware tiling
# ----------------------------------------------------------------------------
def _round_up(x, m):
    return ((x + m - 1) // m) * m


def _vmem_estimate(tile, d, in_bytes):
    # 2 inputs x double-buffer + logits tile and elementwise temporaries (f32).
    return 2 * 2 * tile * d * in_bytes + 8 * tile * tile * 4


def _pick_tiling(b, d, in_bytes, budget_bytes=22 * 1024 * 1024):
    """Returns (padded_batch, tile)."""
    if b < 128:
        b_pad = max(8, _round_up(b, 8))
        return b_pad, b_pad
    b_pad = _round_up(b, 128)
    for tile in (512, 256, 128):
        if b_pad % tile == 0 and _vmem_estimate(tile, d, in_bytes) <= budget_bytes:
            return b_pad, tile
    return b_pad, 128


# ----------------------------------------------------------------------------
# Public wrapper (mirrors ContrastiveLoss.forward)
# ----------------------------------------------------------------------------
def contrastive_loss(video_features, text_features, log_temp=None, *,
                     use_bf16_matmul=True):
    """Pallas implementation of ContrastiveLoss.forward.

    video_features: [B, D], text_features: [B, D], log_temp: scalar.
    Returns a scalar float32 loss.
    """
    if log_temp is None:
        log_temp = jnp.log(jnp.float32(0.1))
    B, D = video_features.shape
    assert text_features.shape == (B, D)

    inv_temp = jnp.exp(-jnp.asarray(log_temp, jnp.float32))

    # ---- hoisted pre-pass (f32 normalization, F.normalize semantics) -------
    v = video_features.astype(jnp.float32)
    t = text_features.astype(jnp.float32)
    vn = v / jnp.maximum(jnp.linalg.norm(v, axis=1, keepdims=True), _EPS)
    tn = t / jnp.maximum(jnp.linalg.norm(t, axis=1, keepdims=True), _EPS)

    # Fold 1/temperature into the video operand, cast MXU operands once.
    op_dtype = jnp.bfloat16 if use_bf16_matmul else jnp.float32
    v_op = (vn * inv_temp).astype(op_dtype)            # (B, D)
    t_op = tn.astype(op_dtype)                         # (B, D)

    # Diagonal targets, computed from the same operands the MXU consumes.
    diag = jnp.sum(v_op.astype(jnp.float32) * t_op.astype(jnp.float32), axis=1)

    # Transpose text once (canonical NN contraction in-kernel, no relayout).
    t_opT = t_op.T                                      # (D, B)

    in_bytes = jnp.dtype(op_dtype).itemsize
    b_pad, tile = _pick_tiling(B, D, in_bytes)
    padded = b_pad != B
    if padded:
        v_op = jnp.pad(v_op, ((0, b_pad - B), (0, 0)))
        t_opT = jnp.pad(t_opT, ((0, 0), (0, b_pad - B)))
    nR = nC = b_pad // tile

    kernel = functools.partial(_contrastive_tile_kernel,
                               b_real=B, tile=tile, padded=padded)

    row_part, col_part = pl.pallas_call(
        kernel,
        out_shape=(jax.ShapeDtypeStruct((nC, b_pad, 1), jnp.float32),
                   jax.ShapeDtypeStruct((nR, 1, b_pad), jnp.float32)),
        grid=(nR, nC),
        in_specs=[
            pl.BlockSpec((tile, D), lambda ri, ci: (ri, 0)),   # video rows
            pl.BlockSpec((D, tile), lambda ri, ci: (0, ci)),   # text cols (pre-T)
        ],
        out_specs=(
            pl.BlockSpec((1, tile, 1), lambda ri, ci: (ci, ri, 0)),  # row partials
            pl.BlockSpec((1, 1, tile), lambda ri, ci: (ri, 0, ci)),  # col partials
        ),
        compiler_params=pltpu.CompilerParams(
            dimension_semantics=("parallel", "parallel"),
            vmem_limit_bytes=32 * 1024 * 1024),
    )(v_op, t_opT)

    # ---- tiny combine in the wrapper ---------------------------------------
    lse_rows = _logsumexp(row_part[:, :B, 0], axis=0)   # (B,) v->t logsumexp
    lse_cols = _logsumexp(col_part[:, 0, :B], axis=0)   # (B,) t->v logsumexp

    loss = (jnp.sum(lse_rows) + jnp.sum(lse_cols)
            - 2.0 * jnp.sum(diag)) * (0.5 / B)
    return loss


# ----------------------------------------------------------------------------
# Pure-JAX reference mirroring the PyTorch forward (exact f32 semantics).
# ----------------------------------------------------------------------------
def _reference_loss(video_features, text_features, log_temp):
    v = video_features.astype(jnp.float32)
    t = text_features.astype(jnp.float32)
    vn = v / jnp.maximum(jnp.linalg.norm(v, axis=1, keepdims=True), _EPS)
    tn = t / jnp.maximum(jnp.linalg.norm(t, axis=1, keepdims=True), _EPS)
    logits = (vn @ tn.T) / jnp.exp(log_temp)
    B = logits.shape[0]
    lse_r = _logsumexp(logits, axis=1)
    lse_c = _logsumexp(logits, axis=0)
    diag = jnp.diagonal(logits)
    loss_v2t = jnp.mean(lse_r - diag)
    loss_t2v = jnp.mean(lse_c - diag)
    return 0.5 * (loss_v2t + loss_t2v)


if __name__ == "__main__":
    log_temp = jnp.log(jnp.float32(0.1))

    def _check(B, D, seed, use_bf16, rtol, atol):
        k1, k2 = jax.random.split(jax.random.PRNGKey(seed))
        video = jax.random.normal(k1, (B, D), dtype=jnp.float32)
        text = jax.random.normal(k2, (B, D), dtype=jnp.float32)
        loss = jax.block_until_ready(
            contrastive_loss(video, text, log_temp, use_bf16_matmul=use_bf16))
        ref = _reference_loss(video, text, log_temp)
        assert jnp.isfinite(loss), (B, D, use_bf16, loss)
        assert jnp.allclose(loss, ref, rtol=rtol, atol=atol), \
            (B, D, use_bf16, loss, ref)

    # Small single-tile path, exact f32 operands (module-scale example).
    _check(8, 32, 0, use_bf16=False, rtol=1e-4, atol=1e-4)
    # Tiled 3x3 grid, bf16 MXU operands (default fast path; looser tolerance).
    _check(384, 256, 1, use_bf16=True, rtol=1e-2, atol=2e-2)
    # Same tiled shape, exact f32 operands (tight tolerance).
    _check(384, 256, 1, use_bf16=False, rtol=1e-4, atol=1e-4)
    # Batch not a multiple of the tile: exercises padding + in-kernel masking.
    _check(200, 160, 2, use_bf16=False, rtol=1e-4, atol=1e-4)

    print("KERNEL_OK")
</pallas_src>

<mosaic_0001>
module attributes {stable_mosaic.version = 11 : i64} {
  func.func @_contrastive_tile_kernel(%arg0: i32, %arg1: i32, %arg2: memref<8x32xf32, #tpu.memory_space<vmem>>, %arg3: memref<32x8xf32, #tpu.memory_space<vmem>>, %arg4: memref<1x8x1xf32, #tpu.memory_space<vmem>>, %arg5: memref<1x1x8xf32, #tpu.memory_space<vmem>>) attributes {dimension_semantics = [#tpu.dimension_semantics<parallel>, #tpu.dimension_semantics<parallel>], iteration_bounds = array<i64: 1, 1>, scalar_prefetch = 0 : i64, scratch_operands = 0 : i64, tpu.core_type = #tpu.core_type<tc>, window_params = [{transform_indices = @transform_0, window_bounds = array<i64: 8, 32>}, {transform_indices = @transform_1, window_bounds = array<i64: 32, 8>}, {transform_indices = @transform_2, window_bounds = array<i64: 1, 8, 1>}, {transform_indices = @transform_3, window_bounds = array<i64: 1, 1, 8>}]} {
    %c0 = arith.constant 0 : index
    %c0_0 = arith.constant 0 : index
    %0 = vector.load %arg2[%c0, %c0_0] : memref<8x32xf32, #tpu.memory_space<vmem>>, vector<8x32xf32>
    %c0_1 = arith.constant 0 : index
    %c0_2 = arith.constant 0 : index
    %1 = vector.load %arg3[%c0_1, %c0_2] : memref<32x8xf32, #tpu.memory_space<vmem>>, vector<32x8xf32>
    %cst = arith.constant dense<0.000000e+00> : vector<8x8xf32>
    %2 = tpu.matmul %0, %1, %cst {dimension_numbers = #tpu.dot_dimension_numbers<[1], [0], [0], [1], [0, 0, 1, 1], [], []>} : vector<8x32xf32>, vector<32x8xf32>, vector<8x8xf32> -> vector<8x8xf32>
    %cst_3 = arith.constant dense<0xFF800000> : vector<8xf32>
    %3 = vector.multi_reduction <maximumf>, %2, %cst_3 [1] : vector<8x8xf32> to vector<8xf32>
    %4 = vector.shape_cast %3 : vector<8xf32> to vector<8x1xf32>
    %5 = vector.broadcast %4 : vector<8x1xf32> to vector<8x8xf32>
    %6 = arith.subf %2, %5 : vector<8x8xf32>
    %7 = math.exp %6 : vector<8x8xf32>
    %cst_4 = arith.constant dense<0.000000e+00> : vector<8xf32>
    %8 = vector.multi_reduction <add>, %7, %cst_4 [1] : vector<8x8xf32> to vector<8xf32>
    %9 = vector.shape_cast %8 : vector<8xf32> to vector<8x1xf32>
    %10 = math.log %9 : vector<8x1xf32>
    %11 = arith.addf %4, %10 : vector<8x1xf32>
    %12 = vector.shape_cast %11 : vector<8x1xf32> to vector<1x8x1xf32>
    %c0_5 = arith.constant 0 : index
    %c0_6 = arith.constant 0 : index
    %c0_7 = arith.constant 0 : index
    %13 = vector.load %arg4[%c0_5, %c0_6, %c0_7] : memref<1x8x1xf32, #tpu.memory_space<vmem>>, vector<1x8x1xf32>
    tpu.vector_store %arg4[%c0_5, %c0_6, %c0_7], %12 {strides = array<i32>} : memref<1x8x1xf32, #tpu.memory_space<vmem>>, vector<1x8x1xf32>,
    %cst_8 = arith.constant dense<0xFF800000> : vector<8xf32>
    %14 = vector.multi_reduction <maximumf>, %2, %cst_8 [0] : vector<8x8xf32> to vector<8xf32>
    %15 = vector.shape_cast %14 : vector<8xf32> to vector<1x8xf32>
    %16 = vector.broadcast %15 : vector<1x8xf32> to vector<8x8xf32>
    %17 = arith.subf %2, %16 : vector<8x8xf32>
    %18 = math.exp %17 : vector<8x8xf32>
    %cst_9 = arith.constant dense<0.000000e+00> : vector<8xf32>
    %19 = vector.multi_reduction <add>, %18, %cst_9 [0] : vector<8x8xf32> to vector<8xf32>
    %20 = vector.shape_cast %19 : vector<8xf32> to vector<1x8xf32>
    %21 = math.log %20 : vector<1x8xf32>
    %22 = arith.addf %15, %21 : vector<1x8xf32>
    %23 = vector.shape_cast %22 : vector<1x8xf32> to vector<1x1x8xf32>
    %c0_10 = arith.constant 0 : index
    %c0_11 = arith.constant 0 : index
    %c0_12 = arith.constant 0 : index
    %24 = vector.load %arg5[%c0_10, %c0_11, %c0_12] : memref<1x1x8xf32, #tpu.memory_space<vmem>>, vector<1x1x8xf32>
    tpu.vector_store %arg5[%c0_10, %c0_11, %c0_12], %23 {strides = array<i32>} : memref<1x1x8xf32, #tpu.memory_space<vmem>>, vector<1x1x8xf32>,
    return
  }
  func.func @transform_0(%arg0: i32, %arg1: i32) -> (i32, i32) {
    %c0_i32 = arith.constant 0 : i32
    %c0_i32_0 = arith.constant 0 : i32
    return %arg0, %c0_i32 : i32, i32
  }
  func.func @transform_1(%arg0: i32, %arg1: i32) -> (i32, i32) {
    %c0_i32 = arith.constant 0 : i32
    %c0_i32_0 = arith.constant 0 : i32
    return %c0_i32, %arg1 : i32, i32
  }
  func.func @transform_2(%arg0: i32, %arg1: i32) -> (i32, i32, i32) {
    %c0_i32 = arith.constant 0 : i32
    %c0_i32_0 = arith.constant 0 : i32
    return %arg1, %arg0, %c0_i32 : i32, i32, i32
  }
  func.func @transform_3(%arg0: i32, %arg1: i32) -> (i32, i32, i32) {
    %c0_i32 = arith.constant 0 : i32
    %c0_i32_0 = arith.constant 0 : i32
    return %arg0, %c0_i32, %arg1 : i32, i32, i32
  }
}

</mosaic_0001>

<llo_original>
// kernel: tpu_custom_call.1
$region0: #{tpu_custom_call.1}
  #allocation0 [shape = 'u32[]', space=smem, size = 0x4, offset = 0x4, fixed_abs, tag = 'smem constant byte address 0x4 - core index']
  #allocation1 [shape = 'u32[144,128]{1,0:T(1,128)}', space=vmem, size = 0x12000, scoped, tag = 'internal scratch']
  %s0 = inlined_call_operand.vmem [shape: f32[8,32], index: 0, kind: input, shape index: {}]
  %s1 = inlined_call_operand.vmem [shape: f32[32,8], index: 1, kind: input, shape index: {}]
  %s2 = inlined_call_operand.vmem [shape: f32[1,8,1], index: 2, kind: output, shape index: {0}]
  %s3 = inlined_call_operand.hbm [shape: f32[1,1,8], index: 3, kind: output, shape index: {1}]
  %4 = xla_tuple %s2, %s3
  %s5 = sld [smem:[#allocation0]]
  $region26: #{tpu_custom_call.1} parent=0
    _
  %s7 = ssub.s32 1, %s5
  %s8 = scalar_select 0, %s7, %s5
  $region1: #{tpu_custom_call.1} parent=0
    #allocation2 [shape = 'u8[512]{0}', space=vmem, size = 0x400, scoped, tag = 'output window, operand 1, single buffered']
    #allocation3 [shape = 's32[1]{0}', space=sflag, size = 0x4, scoped, tag = 'scoped memory for tpu_custom_call.1']
    %9 = vsyncpa [#allocation3], 0
    // Predicated region
    $region2: #{tpu_custom_call.1} parent=1 // pred_check
      _
    $region3: #{tpu_custom_call.1} parent=1 // pred_check_branch
      %11 = sbr.rel (0) target = $region5
    $region4: #{tpu_custom_call.1} parent=1 // pred_region
      _
    $region5: #{tpu_custom_call.1} parent=1 // pred_fallthru
      _
    // Predicated region
    $region6: #{tpu_custom_call.1} parent=1 // pred_check
      _
    $region7: #{tpu_custom_call.1} parent=1 // pred_check_branch
      %13 = sbr.rel (0) target = $region9
    $region8: #{tpu_custom_call.1} parent=1 // pred_region
      _
    $region9: #{tpu_custom_call.1} parent=1 // pred_fallthru
      _
    %v14 = vld [vmem:[%s0] sm:$0xff]
    %v15 = vld [vmem:[%s1] sm:$0xff]
    %v16 = vld [vmem:[%s1 + $0x8] sm:$0xff]
    %v17 = vld [vmem:[%s1 + $0x10] sm:$0xff]
    %v18 = vld [vmem:[%s1 + $0x18] sm:$0xff]
    %vm19 = vcmask 261120
    %v21 = vsel %vm19, %v14, 0
    %23 = vmatprep.subr.mxu0 0.0
    %24 = vmatpush1.msra.mxu0 %v15
    %25 = vmatprep.subr.mxu0 0.0
    %26 = vmatpush1.msra.mxu0 %v16
    %27 = vmatprep.subr.mxu0 0.0
    %28 = vmatpush1.msra.mxu0 %v17
    %29 = vmatprep.subr.mxu0 0.0
    %30 = vmatpush1.msra.mxu0 %v18
    %31 = vmatprep.subr.mxu0 0.0
    %32 = vmatpush1.msra.mxu0 0.0
    %33 = vmatprep.subr.mxu0 0.0
    %34 = vmatpush1.msra.mxu0 0.0
    %35 = vmatprep.subr.mxu0 0.0
    %36 = vmatpush1.msra.mxu0 0.0
    %37 = vmatprep.subr.mxu0 0.0
    %38 = vmatpush1.msra.mxu0 0.0
    %39 = vmatprep.subr.mxu0 0.0
    %40 = vmatpush1.msra.mxu0 0.0
    %41 = vmatprep.subr.mxu0 0.0
    %42 = vmatpush1.msra.mxu0 0.0
    %43 = vmatprep.subr.mxu0 0.0
    %44 = vmatpush1.msra.mxu0 0.0
    %45 = vmatprep.subr.mxu0 0.0
    %46 = vmatpush1.msra.mxu0 0.0
    %47 = vmatprep.subr.mxu0 0.0
    %48 = vmatpush1.msra.mxu0 0.0
    %49 = vmatprep.subr.mxu0 0.0
    %50 = vmatpush1.msra.mxu0 0.0
    %51 = vmatprep.subr.mxu0 0.0
    %52 = vmatpush1.msra.mxu0 0.0
    %53 = vmatprep.subr.mxu0 0.0
    %54 = vmatpush1.msra.mxu0 0.0
    %55 = vmatprep.subr.mxu0 0.0
    %56 = vmatpush1.msra.mxu0 0.0
    %57 = vmatprep.subr.mxu0 0.0
    %58 = vmatpush1.msra.mxu0 0.0
    %59 = vmatprep.subr.mxu0 0.0
    %60 = vmatpush1.msra.mxu0 0.0
    %61 = vmatprep.subr.mxu0 0.0
    %62 = vmatpush1.msra.mxu0 0.0
    %63 = vmatprep.subr.mxu0 0.0
    %64 = vmatpush1.msra.mxu0 0.0
    %65 = vmatprep.subr.mxu0 0.0
    %66 = vmatpush1.msra.mxu0 0.0
    %67 = vmatprep.subr.mxu0 0.0
    %68 = vmatpush1.msra.mxu0 0.0
    %69 = vmatprep.subr.mxu0 0.0
    %70 = vmatpush1.msra.mxu0 0.0
    %71 = vmatprep.subr.mxu0 0.0
    %72 = vmatpush1.msra.mxu0 0.0
    %73 = vmatprep.subr.mxu0 0.0
    %74 = vmatpush1.msra.mxu0 0.0
    %75 = vmatprep.subr.mxu0 0.0
    %76 = vmatpush1.msra.mxu0 0.0
    %77 = vmatprep.subr.mxu0 0.0
    %78 = vmatpush1.msra.mxu0 0.0
    %79 = vmatprep.subr.mxu0 0.0
    %80 = vmatpush1.msra.mxu0 0.0
    %81 = vmatprep.subr.mxu0 0.0
    %82 = vmatpush1.msra.mxu0 0.0
    %83 = vmatprep.subr.mxu0 0.0
    %84 = vmatpush1.msra.mxu0 0.0
    %85 = vmatprep.subr.mxu0 0.0
    %86 = vmatpush1.msra.mxu0 0.0
    %87 = vmatprep.mubr.f32.mxu0 0.0
    %88 = vmatmul.mubr.f32.gmra.mrb[0].mxu0 %v21
    %v89 = vpop.f32.mrb[0].mxu0
    %v90 = vadd.f32 0.0, %v89
    %v91 = vpop.f32.mrb[0].mxu0
    %92 = vdwg.mxu0
    %vm93 = vcmask 64512
    %v94 = vsel %vm93, %v90, -inf
    %95 = vmax.xlane.f32.xlu0 %v94
    %v96 = vpop.xlane.xlu0 %95
    %v97 = vsub.f32 %v90, %v96
    %v98 = vmul.f32 %v97, 1.442695
    %v99 = vpow.pop %v98
    %v100 = vsel %vm93, %v99, 0.0
    %101 = vadd.xlane.f32.xlu0 %v100
    %v102 = vpop.xlane.xlu0 %101
    %v103 = vlog2.pop %v102
    %v104 = vmul.f32 %v103, 0.6931472
    %v105 = vadd.f32 %v96, %v104
    %vm106 = vcmask 7168
    %107 = vst.msk [vmem:[%s2] sm:$0xff] %vm106, %v105
    %v108 = vrot.slane %v94, 4
    %v109 = vmax.f32 %v94, %v108
    %v110 = vrot.slane %v109, 2
    %v111 = vmax.f32 %v109, %v110
    %v112 = vrot.slane %v111, 1
    %v113 = vmax.f32 %v111, %v112
    %v114 = vsub.f32 %v90, %v113
    %v115 = vmul.f32 %v114, 1.442695
    %v116 = vpow.pop %v115
    %v117 = vsel %vm93, %v116, 0.0
    %v118 = vrot.slane %v117, 4
    %v119 = vadd.f32 %v117, %v118
    %v120 = vrot.slane %v119, 2
    %v121 = vadd.f32 %v119, %v120
    %v122 = vrot.slane %v121, 1
    %v123 = vadd.f32 %v121, %v122
    %v124 = vlog2.pop %v123
    %v125 = vmul.f32 %v124, 0.6931472
    %v126 = vadd.f32 %v113, %v125
    %vm127 = vcmask 57344
    %128 = vst.msk [vmem:[#allocation2] sm:$0x1] %vm127, %v126
    // Predicated region
    $region10: #{tpu_custom_call.1} parent=1 // pred_check
      _
    $region11: #{tpu_custom_call.1} parent=1 // pred_check_branch
      %130 = sbr.rel (0) target = $region13
    $region12: #{tpu_custom_call.1} parent=1 // pred_region
      _
    $region13: #{tpu_custom_call.1} parent=1 // pred_fallthru
      _
    // Predicated region
    $region14: #{tpu_custom_call.1} parent=1 // pred_check
      _
    $region15: #{tpu_custom_call.1} parent=1 // pred_check_branch
      %132 = sbr.rel (0) target = $region17
    $region16: #{tpu_custom_call.1} parent=1 // pred_region
      %s134 = ssub.s32 16, 16
      %135 = vsyncadd [#allocation3], %s134
      %s137 = sshll.u32 [#allocation2], 4
      %s138 = int_to_ptr.vmem [resolvable:$true] %s137
      %140 = dma.vmem_to_hbm [thread:$0]  %s138, 16, %s3, [#allocation3]
    $region17: #{tpu_custom_call.1} parent=1 // pred_fallthru
      _
    // Predicated region
    $region18: #{tpu_custom_call.1} parent=1 // pred_check
      _
    $region19: #{tpu_custom_call.1} parent=1 // pred_check_branch
      %142 = sbr.rel (0) target = $region21
    $region20: #{tpu_custom_call.1} parent=1 // pred_region
      _
    $region21: #{tpu_custom_call.1} parent=1 // pred_fallthru
      _
    // Predicated region
    $region22: #{tpu_custom_call.1} parent=1 // pred_check
      _
    $region23: #{tpu_custom_call.1} parent=1 // pred_check_branch
      %144 = sbr.rel (0) target = $region25
    $region24: #{tpu_custom_call.1} parent=1 // pred_region
      %145 = dma.done [#allocation3], 16
    $region25: #{tpu_custom_call.1} parent=1 // pred_fallthru
      _
    %146 = vsyncpa [#allocation3], 1

</llo_original>
